<compile_context>
chip_gen: v5e
topology: v5e:2x2
jax: 0.10.0
libtpu: 0.0.40
codegen_flags: <defaults>
</compile_context>

<pallas_src>
import math

import jax
import jax.numpy as jnp
from jax.experimental import pallas as pl
from jax.experimental.pallas import tpu as pltpu


# --------------------------- chip-aware sizing ------------------------------ #

_PALLAS_MIN_ROWS = 1024        # below this, a single fused XLA op is cheaper
_VMEM_LIMIT_CACHE = None


def _vmem_limit_bytes():
    """Scoped-VMEM limit derived from the chip's physical VMEM capacity.

    v5e/v6e: 128 MiB physical -> 96 MiB scoped; v7x: 64 MiB -> 48 MiB.
    """
    global _VMEM_LIMIT_CACHE
    if _VMEM_LIMIT_CACHE is None:
        cap = 64 * 1024 * 1024                       # conservative default
        try:
            cap = int(getattr(pltpu.get_tpu_info(), "vmem_capacity_bytes", cap))
        except Exception:
            pass
        _VMEM_LIMIT_CACHE = min((cap * 3) // 4, 128 * 1024 * 1024)
    return _VMEM_LIMIT_CACHE


def _compiler_params():
    return pltpu.CompilerParams(
        dimension_semantics=("parallel",),           # shard rows across TCs
        vmem_limit_bytes=int(_vmem_limit_bytes()),
    )


def _round_down8(x):
    return max(8, (int(x) // 8) * 8)


def _round_up8(x):
    return ((int(x) + 7) // 8) * 8


def _tile_rows(n_rows, row_bytes, min_tiles=2):
    """Rows per tile for a row-streaming kernel.

    row_bytes: bytes per row summed over all pipelined arrays (inputs+outputs).
    Rule: fill ~half the scoped VMEM limit with double-buffered tiles
    (amortizes the ~0.35 us per-grid-step overhead), then clamp so the grid
    has at least `min_tiles` steps (megacore sharding on v7x).
    """
    budget = _vmem_limit_bytes() // 2
    cap = _round_down8(budget // (2 * row_bytes))    # 2 = double buffering
    if n_rows > 8 * min_tiles:
        cap = min(cap, _round_up8(pl.cdiv(n_rows, min_tiles)))
    return n_rows if cap >= n_rows else cap


# ------------------------------- 'concat' ---------------------------------- #
# cat(Xs, -1) @ W + b, with the concat fused into the kernel:
#   out = sum_l X_l @ W_l + b      (W_l pre-split on the host)

def concat_linear_pallas(Xs, W, b):
    n = Xs[0].shape[0]
    dims = [x.shape[1] for x in Xs]
    in_dim, out_dim = W.shape
    assert sum(dims) == in_dim
    L = len(Xs)
    isz = Xs[0].dtype.itemsize

    # One-time host-side split: no per-grid-step in-VMEM weight slicing.
    Ws, off = [], 0
    for dl in dims:
        Ws.append(W[off:off + dl, :])
        off += dl

    row_bytes = (sum(dims) + out_dim) * isz
    tn = _tile_rows(n, row_bytes)

    def kernel(*refs):
        x_refs = refs[:L]
        w_refs = refs[L:2 * L]
        b_ref = refs[2 * L]
        o_ref = refs[2 * L + 1]
        acc = jnp.dot(x_refs[0][...], w_refs[0][...],
                      preferred_element_type=jnp.float32)
        for l in range(1, L):
            acc += jnp.dot(x_refs[l][...], w_refs[l][...],
                           preferred_element_type=jnp.float32)
        # TODO(synk): if stores show up as exposed cost, experiment with a
        # lane-dense [tn,32]->[tn//4,128] reshape of the output block.
        o_ref[...] = (acc + b_ref[...].astype(jnp.float32)).astype(o_ref.dtype)

    in_specs = [pl.BlockSpec((tn, dl), lambda i: (i, 0)) for dl in dims]
    in_specs += [pl.BlockSpec((dl, out_dim), lambda i: (0, 0)) for dl in dims]
    in_specs += [pl.BlockSpec((1, out_dim), lambda i: (0, 0))]

    cost = pl.CostEstimate(
        flops=2 * n * in_dim * out_dim + n * out_dim,
        transcendentals=0,
        bytes_accessed=(n * in_dim * isz + in_dim * out_dim * W.dtype.itemsize
                        + out_dim * b.dtype.itemsize + n * out_dim * isz),
    )
    return pl.pallas_call(
        kernel,
        out_shape=jax.ShapeDtypeStruct((n, out_dim), Xs[0].dtype),
        grid=(pl.cdiv(n, tn),),
        in_specs=in_specs,
        out_specs=pl.BlockSpec((tn, out_dim), lambda i: (i, 0)),
        compiler_params=_compiler_params(),
        cost_estimate=cost,
    )(*Xs, *Ws, b)


# ------------------------------- 'maxpool' --------------------------------- #
# stack(Xs, -1).max(-1) == elementwise max over the L layers (fused, no stack)

def maxpool_pallas(Xs):
    n, d = Xs[0].shape
    # Lane-dense fast path: purely elementwise, so view each [N, d] array as
    # [N*d/128, 128] (free row-major reshape) -> unmasked vld/vst, full vregs.
    if d < 128 and (n * d) % 128 == 0:
        rows = (n * d) // 128
        out = _maxpool_core([x.reshape(rows, 128) for x in Xs])
        return out.reshape(n, d)
    return _maxpool_core(Xs)


def _maxpool_core(Xs):
    n, d = Xs[0].shape
    L = len(Xs)
    isz = Xs[0].dtype.itemsize
    tn = _tile_rows(n, (L + 1) * d * isz)

    def kernel(*refs):
        o_ref = refs[L]
        m = refs[0][...]
        for l in range(1, L):
            m = jnp.maximum(m, refs[l][...])
        o_ref[...] = m

    spec = pl.BlockSpec((tn, d), lambda i: (i, 0))
    cost = pl.CostEstimate(flops=(L - 1) * n * d, transcendentals=0,
                           bytes_accessed=(L + 1) * n * d * isz)
    return pl.pallas_call(
        kernel,
        out_shape=jax.ShapeDtypeStruct((n, d), Xs[0].dtype),
        grid=(pl.cdiv(n, tn),),
        in_specs=[spec] * L,
        out_specs=spec,
        compiler_params=_compiler_params(),
        cost_estimate=cost,
    )(*Xs)


# ------------------------------ 'attention' -------------------------------- #
# score_l = sigmoid(X_l @ W_att + b);  out = sum_l score_l * X_l
# (equivalent to torch: sigmoid(layer_att(stack(Xs,1))) batched-matmul stack)

def attention_pallas(Xs, W_att, b_att):
    n, f = Xs[0].shape
    L = len(Xs)
    assert f == W_att.shape[0]
    isz = Xs[0].dtype.itemsize
    w_row = W_att.reshape(1, f).astype(jnp.float32)   # lane-major row vector

    tn = _tile_rows(n, (L + 1) * f * isz)

    def kernel(*refs):
        x_refs = refs[:L]
        w_ref = refs[L]                 # [1, F] f32 in VMEM
        b_ref = refs[L + 1]             # [1, 1] scalar in SMEM
        o_ref = refs[L + 2]
        w = w_ref[...]
        bias = b_ref[0, 0]
        acc = jnp.zeros(o_ref.shape, jnp.float32)
        for l in range(L):
            x = x_refs[l][...]
            # Score: VPU multiply + lane (XLU) reduction in f32; sigmoid on
            # the EUP. No degenerate [*,512]x[512,1] MXU matmul.
            s = jnp.sum(x.astype(jnp.float32) * w, axis=-1, keepdims=True) + bias
            score = jax.nn.sigmoid(s)                        # [tn, 1] f32
            # Scale in the activation dtype (bf16 VALU on v6e/v7x); the add
            # promotes into the f32 accumulator.
            acc = acc + score.astype(x.dtype) * x
        o_ref[...] = acc.astype(o_ref.dtype)

    x_spec = pl.BlockSpec((tn, f), lambda i: (i, 0))
    in_specs = [x_spec] * L + [
        pl.BlockSpec((1, f), lambda i: (0, 0)),
        pl.BlockSpec(memory_space=pltpu.MemorySpace.SMEM),   # scalar bias
    ]
    cost = pl.CostEstimate(
        flops=4 * L * n * f,
        transcendentals=L * n,
        bytes_accessed=(L + 1) * n * f * isz + f * 4 + 4,
    )
    return pl.pallas_call(
        kernel,
        out_shape=jax.ShapeDtypeStruct((n, f), Xs[0].dtype),
        grid=(pl.cdiv(n, tn),),
        in_specs=in_specs,
        out_specs=pl.BlockSpec((tn, f), lambda i: (i, 0)),
        compiler_params=_compiler_params(),
        cost_estimate=cost,
    )(*Xs, w_row, b_att)


# -------------------------------- reference --------------------------------- #

def _ref_concat(Xs, W, b):
    return jnp.concatenate(Xs, axis=-1) @ W + b


def _ref_maxpool(Xs):
    return jnp.max(jnp.stack(Xs, axis=-1), axis=-1)


def _ref_attention(Xs, W, b):
    pps = jnp.stack(Xs, axis=1)
    scores = jax.nn.sigmoid((pps @ W)[..., 0] + b[0, 0])      # [N, L]
    return jnp.einsum('nl,nlf->nf', scores, pps)


# --------------------------------- Module ---------------------------------- #

class DenseConnection:
    """JAX/Pallas port of DenseConnection. Parameters initialized like
    torch.nn.Linear (uniform +-1/sqrt(fan_in)), deterministically from a key.

    Below _PALLAS_MIN_ROWS rows the plain fused XLA expression is used
    (kernel launch overhead dominates at degenerate sizes); `force_pallas`
    forces the Pallas path regardless of size."""

    def __init__(self, in_dim, out_dim, aggregation='concat', key=None,
                 force_pallas=False):
        if key is None:
            key = jax.random.PRNGKey(0)
        self.in_dim = in_dim
        self.out_dim = out_dim
        self.aggregation = aggregation
        self.force_pallas = force_pallas
        if aggregation == 'concat':
            k1, k2 = jax.random.split(key)
            bound = 1.0 / math.sqrt(in_dim)
            # stored as [in_dim, out_dim] (transposed vs torch's [out,in])
            self.W = jax.random.uniform(k1, (in_dim, out_dim), jnp.float32,
                                        -bound, bound)
            self.b = jax.random.uniform(k2, (1, out_dim), jnp.float32,
                                        -bound, bound)
        elif aggregation == 'attention':
            k1, k2 = jax.random.split(key)
            bound = 1.0 / math.sqrt(512)
            self.W_att = jax.random.uniform(k1, (512, 1), jnp.float32,
                                            -bound, bound)
            self.b_att = jax.random.uniform(k2, (1, 1), jnp.float32,
                                            -bound, bound)

    def __call__(self, Xs):
        assert len(Xs) >= 1
        n = Xs[0].shape[0]
        use_pallas = self.force_pallas or n >= _PALLAS_MIN_ROWS
        if self.aggregation == 'concat':
            if use_pallas:
                return concat_linear_pallas(Xs, self.W, self.b)
            return _ref_concat(Xs, self.W, self.b)
        elif self.aggregation == 'maxpool':
            if use_pallas:
                return maxpool_pallas(Xs)
            return _ref_maxpool(Xs)
        elif self.aggregation == 'attention':
            if use_pallas:
                return attention_pallas(Xs, self.W_att, self.b_att)
            return _ref_attention(Xs, self.W_att, self.b_att)
        else:
            raise Exception('Unknown aggregation')


# ----------------------------------- main ----------------------------------- #

if __name__ == "__main__":
    key = jax.random.PRNGKey(0)
    k_in, k_mod1, k_mod2 = jax.random.split(key, 3)

    # ---- concat / maxpool: 3 GAT layer outputs, 256 nodes, 32 features each
    N, d, L = 256, 32, 3
    keys = jax.random.split(k_in, L + 3)
    Xs = [jax.random.normal(keys[i], (N, d), jnp.float32) for i in range(L)]

    concat_mod = DenseConnection(in_dim=L * d, out_dim=d, aggregation='concat',
                                 key=k_mod1, force_pallas=True)
    out_concat = jax.block_until_ready(concat_mod(Xs))
    ref_concat = _ref_concat(Xs, concat_mod.W, concat_mod.b)
    assert out_concat.shape == (N, d)
    assert jnp.allclose(out_concat, ref_concat, rtol=1e-3, atol=1e-3)

    maxpool_mod = DenseConnection(in_dim=L * d, out_dim=d, aggregation='maxpool',
                                  key=k_mod1, force_pallas=True)
    out_max = jax.block_until_ready(maxpool_mod(Xs))
    assert out_max.shape == (N, d)
    assert jnp.allclose(out_max, _ref_maxpool(Xs), rtol=1e-6, atol=1e-6)

    # ---- attention: layer_att is hard-wired to Linear(512, 1) in the module
    Na, fa = 128, 512
    Xs_att = [jax.random.normal(keys[L + i], (Na, fa), jnp.float32)
              for i in range(L)]
    att_mod = DenseConnection(in_dim=L * fa, out_dim=fa, aggregation='attention',
                              key=k_mod2, force_pallas=True)
    out_att = jax.block_until_ready(att_mod(Xs_att))
    ref_att = _ref_attention(Xs_att, att_mod.W_att, att_mod.b_att)
    assert out_att.shape == (Na, fa)
    assert jnp.allclose(out_att, ref_att, rtol=1e-3, atol=1e-3)

    # ---- degenerate-size gating: tiny N falls back to plain XLA
    tiny_mod = DenseConnection(in_dim=L * d, out_dim=d, aggregation='maxpool')
    Xs_tiny = [x[:8] for x in Xs]
    out_tiny = jax.block_until_ready(tiny_mod(Xs_tiny))
    assert jnp.allclose(out_tiny, _ref_maxpool(Xs_tiny))

    print("KERNEL_OK")
</pallas_src>

<mosaic_0001>
module attributes {stable_mosaic.version = 11 : i64} {
  func.func @kernel(%arg0: i32, %arg1: memref<128x32xf32, #tpu.memory_space<vmem>>, %arg2: memref<128x32xf32, #tpu.memory_space<vmem>>, %arg3: memref<128x32xf32, #tpu.memory_space<vmem>>, %arg4: memref<32x32xf32, #tpu.memory_space<vmem>>, %arg5: memref<32x32xf32, #tpu.memory_space<vmem>>, %arg6: memref<32x32xf32, #tpu.memory_space<vmem>>, %arg7: memref<1x32xf32, #tpu.memory_space<vmem>>, %arg8: memref<128x32xf32, #tpu.memory_space<vmem>>) attributes {dimension_semantics = [#tpu.dimension_semantics<parallel>], iteration_bounds = array<i64: 2>, scalar_prefetch = 0 : i64, scratch_operands = 0 : i64, tpu.core_type = #tpu.core_type<tc>, window_params = [{transform_indices = @transform_0, window_bounds = array<i64: 128, 32>}, {transform_indices = @transform_1, window_bounds = array<i64: 128, 32>}, {transform_indices = @transform_2, window_bounds = array<i64: 128, 32>}, {pipeline_mode = #tpu.pipeline_mode<synchronous>, transform_indices = @transform_3, window_bounds = array<i64: 32, 32>}, {pipeline_mode = #tpu.pipeline_mode<synchronous>, transform_indices = @transform_4, window_bounds = array<i64: 32, 32>}, {pipeline_mode = #tpu.pipeline_mode<synchronous>, transform_indices = @transform_5, window_bounds = array<i64: 32, 32>}, {pipeline_mode = #tpu.pipeline_mode<synchronous>, transform_indices = @transform_6, window_bounds = array<i64: 1, 32>}, {transform_indices = @transform_7, window_bounds = array<i64: 128, 32>}]} {
    %c0 = arith.constant 0 : index
    %c0_0 = arith.constant 0 : index
    %0 = vector.load %arg1[%c0, %c0_0] : memref<128x32xf32, #tpu.memory_space<vmem>>, vector<128x32xf32>
    %c0_1 = arith.constant 0 : index
    %c0_2 = arith.constant 0 : index
    %1 = vector.load %arg4[%c0_1, %c0_2] : memref<32x32xf32, #tpu.memory_space<vmem>>, vector<32x32xf32>
    %cst = arith.constant dense<0.000000e+00> : vector<128x32xf32>
    %2 = tpu.matmul %0, %1, %cst {dimension_numbers = #tpu.dot_dimension_numbers<[1], [0], [0], [1], [0, 0, 1, 1], [], []>} : vector<128x32xf32>, vector<32x32xf32>, vector<128x32xf32> -> vector<128x32xf32>
    %c0_3 = arith.constant 0 : index
    %c0_4 = arith.constant 0 : index
    %3 = vector.load %arg2[%c0_3, %c0_4] : memref<128x32xf32, #tpu.memory_space<vmem>>, vector<128x32xf32>
    %c0_5 = arith.constant 0 : index
    %c0_6 = arith.constant 0 : index
    %4 = vector.load %arg5[%c0_5, %c0_6] : memref<32x32xf32, #tpu.memory_space<vmem>>, vector<32x32xf32>
    %cst_7 = arith.constant dense<0.000000e+00> : vector<128x32xf32>
    %5 = tpu.matmul %3, %4, %cst_7 {dimension_numbers = #tpu.dot_dimension_numbers<[1], [0], [0], [1], [0, 0, 1, 1], [], []>} : vector<128x32xf32>, vector<32x32xf32>, vector<128x32xf32> -> vector<128x32xf32>
    %6 = arith.addf %2, %5 : vector<128x32xf32>
    %c0_8 = arith.constant 0 : index
    %c0_9 = arith.constant 0 : index
    %7 = vector.load %arg3[%c0_8, %c0_9] : memref<128x32xf32, #tpu.memory_space<vmem>>, vector<128x32xf32>
    %c0_10 = arith.constant 0 : index
    %c0_11 = arith.constant 0 : index
    %8 = vector.load %arg6[%c0_10, %c0_11] : memref<32x32xf32, #tpu.memory_space<vmem>>, vector<32x32xf32>
    %cst_12 = arith.constant dense<0.000000e+00> : vector<128x32xf32>
    %9 = tpu.matmul %7, %8, %cst_12 {dimension_numbers = #tpu.dot_dimension_numbers<[1], [0], [0], [1], [0, 0, 1, 1], [], []>} : vector<128x32xf32>, vector<32x32xf32>, vector<128x32xf32> -> vector<128x32xf32>
    %10 = arith.addf %6, %9 : vector<128x32xf32>
    %c0_13 = arith.constant 0 : index
    %c0_14 = arith.constant 0 : index
    %11 = vector.load %arg7[%c0_13, %c0_14] : memref<1x32xf32, #tpu.memory_space<vmem>>, vector<1x32xf32>
    %12 = vector.broadcast %11 : vector<1x32xf32> to vector<128x32xf32>
    %13 = arith.addf %10, %12 : vector<128x32xf32>
    %c0_15 = arith.constant 0 : index
    %c0_16 = arith.constant 0 : index
    %14 = vector.load %arg8[%c0_15, %c0_16] : memref<128x32xf32, #tpu.memory_space<vmem>>, vector<128x32xf32>
    tpu.vector_store %arg8[%c0_15, %c0_16], %13 {strides = array<i32>} : memref<128x32xf32, #tpu.memory_space<vmem>>, vector<128x32xf32>,
    return
  }
  func.func @transform_0(%arg0: i32) -> (i32, i32) {
    %c0_i32 = arith.constant 0 : i32
    %c0_i32_0 = arith.constant 0 : i32
    return %arg0, %c0_i32 : i32, i32
  }
  func.func @transform_1(%arg0: i32) -> (i32, i32) {
    %c0_i32 = arith.constant 0 : i32
    %c0_i32_0 = arith.constant 0 : i32
    return %arg0, %c0_i32 : i32, i32
  }
  func.func @transform_2(%arg0: i32) -> (i32, i32) {
    %c0_i32 = arith.constant 0 : i32
    %c0_i32_0 = arith.constant 0 : i32
    return %arg0, %c0_i32 : i32, i32
  }
  func.func @transform_3(%arg0: i32) -> (i32, i32) {
    %c0_i32 = arith.constant 0 : i32
    %c0_i32_0 = arith.constant 0 : i32
    %c0_i32_1 = arith.constant 0 : i32
    return %c0_i32, %c0_i32_0 : i32, i32
  }
  func.func @transform_4(%arg0: i32) -> (i32, i32) {
    %c0_i32 = arith.constant 0 : i32
    %c0_i32_0 = arith.constant 0 : i32
    %c0_i32_1 = arith.constant 0 : i32
    return %c0_i32, %c0_i32_0 : i32, i32
  }
  func.func @transform_5(%arg0: i32) -> (i32, i32) {
    %c0_i32 = arith.constant 0 : i32
    %c0_i32_0 = arith.constant 0 : i32
    %c0_i32_1 = arith.constant 0 : i32
    return %c0_i32, %c0_i32_0 : i32, i32
  }
  func.func @transform_6(%arg0: i32) -> (i32, i32) {
    %c0_i32 = arith.constant 0 : i32
    %c0_i32_0 = arith.constant 0 : i32
    %c0_i32_1 = arith.constant 0 : i32
    return %c0_i32, %c0_i32_0 : i32, i32
  }
  func.func @transform_7(%arg0: i32) -> (i32, i32) {
    %c0_i32 = arith.constant 0 : i32
    %c0_i32_0 = arith.constant 0 : i32
    return %arg0, %c0_i32 : i32, i32
  }
}

</mosaic_0001>

<llo_original>
// kernel: tpu_custom_call.1
$region0: #{tpu_custom_call.1}
  #allocation0 [shape = 'u32[]', space=smem, size = 0x4, offset = 0x4, fixed_abs, tag = 'smem constant byte address 0x4 - core index']
  #allocation1 [shape = 'u32[72,128]{1,0:T(1,128)}', space=vmem, size = 0x9000, scoped, tag = 'internal scratch']
  %s0 = inlined_call_operand.vmem [shape: f32[256,32], index: 0, kind: input, shape index: {}]
  %s1 = inlined_call_operand.vmem [shape: f32[256,32], index: 1, kind: input, shape index: {}]
  %s2 = inlined_call_operand.vmem [shape: f32[256,32], index: 2, kind: input, shape index: {}]
  %s3 = inlined_call_operand.vmem [shape: f32[32,32], index: 3, kind: input, shape index: {}]
  %s4 = inlined_call_operand.vmem [shape: f32[32,32], index: 4, kind: input, shape index: {}]
  %s5 = inlined_call_operand.vmem [shape: f32[32,32], index: 5, kind: input, shape index: {}]
  %s6 = inlined_call_operand.vmem [shape: f32[1,32], index: 6, kind: input, shape index: {}]
  %s7 = inlined_call_operand.vmem [shape: f32[256,32], index: 7, kind: output, shape index: {}]
  %s8 = sld [smem:[#allocation0]]
  $region61: #{tpu_custom_call.1} parent=0
    _
  %s10 = ssub.s32 1, %s8
  %s11 = scalar_select 0, %s10, %s8
  loop: start=0, step=1, limit=4
  $region2: #{tpu_custom_call.1} parent=0 // loop_pre_header
    _
  $region3: #{tpu_custom_call.1} parent=0 // loop_header
    %s13 = sphi 0, %s17
    %p14 = scmp.ge.s32.totalorder %s13, 4
    %s23 = sphi 0, %s25
    %s26 = sphi 0, %s23
    %s27 = sphi 0, %s26
    %s43 = sphi 0, %s27
    %s49 = sphi 0, %s51
    %s52 = sphi 0, %s49
    %s53 = sphi 0, %s52
    %s69 = sphi 0, %s53
    %s75 = sphi 0, %s77
    %s78 = sphi 0, %s75
    %s79 = sphi 0, %s78
    %s95 = sphi 0, %s79
    %s99 = sphi 0, %s99
    %s101 = sphi 0, %s99
    %s102 = sphi 0, %s101
    %s116 = sphi 0, %s102
    %s120 = sphi 0, %s120
    %s122 = sphi 0, %s120
    %s123 = sphi 0, %s122
    %s137 = sphi 0, %s123
    %s141 = sphi 0, %s141
    %s143 = sphi 0, %s141
    %s144 = sphi 0, %s143
    %s158 = sphi 0, %s144
    %s162 = sphi 0, %s162
    %s164 = sphi 0, %s162
    %s165 = sphi 0, %s164
    %s179 = sphi 0, %s165
    %s185 = sphi 0, %s187
    %s188 = sphi 0, %s185
    %s189 = sphi 0, %s188
    %s205 = sphi 0, %s189
  $region4: #{tpu_custom_call.1} parent=0 // loop_header_branch
    %16 = sbr.rel (%p14) target = $region8
  $region5: #{tpu_custom_call.1} parent=0 // loop_body
    %s18 = ssub.s32 %s13, 1
    %s19 = ssub.s32 %s13, 2
    %s20 = sadd.s32 %s13, 1
    %s21 = ssub.s32 %s13, %s20
    %p22 = scmp.eq.s32.totalorder %s21, 0
    %s24 = sadd.s32 %s23, 1
    %s25 = scalar_select %p22, %s23, %s24
    %p28 = pneg %p22
    %p29 = scmp.eq.s32.totalorder %s13, 1
    %p30 = por %p28, %p29
    %p31 = scmp.ne.s32.totalorder %s23, %s26
    %p32 = scmp.eq.s32.totalorder %s13, 0
    %p33 = por %p31, %p32
    %p34 = scmp.ne.s32.totalorder %s23, %s26
    %p35 = scmp.eq.s32.totalorder %s18, 1
    %p36 = por %p34, %p35
    %p37 = scmp.ne.s32.totalorder %s26, %s27
    %p38 = scmp.eq.s32.totalorder %s18, 0
    %p39 = por %p37, %p38
    %p40 = scmp.ne.s32.totalorder %s26, %s27
    %p41 = scmp.eq.s32.totalorder %s19, 1
    %p42 = por %p40, %p41
    %p44 = scmp.ne.s32.totalorder %s27, %s43
    %p45 = scmp.eq.s32.totalorder %s19, 0
    %p46 = por %p44, %p45
    %s47 = ssub.s32 %s13, %s20
    %p48 = scmp.eq.s32.totalorder %s47, 0
    %s50 = sadd.s32 %s49, 1
    %s51 = scalar_select %p48, %s49, %s50
    %p54 = pneg %p48
    %p55 = scmp.eq.s32.totalorder %s13, 1
    %p56 = por %p54, %p55
    %p57 = scmp.ne.s32.totalorder %s49, %s52
    %p58 = scmp.eq.s32.totalorder %s13, 0
    %p59 = por %p57, %p58
    %p60 = scmp.ne.s32.totalorder %s49, %s52
    %p61 = scmp.eq.s32.totalorder %s18, 1
    %p62 = por %p60, %p61
    %p63 = scmp.ne.s32.totalorder %s52, %s53
    %p64 = scmp.eq.s32.totalorder %s18, 0
    %p65 = por %p63, %p64
    %p66 = scmp.ne.s32.totalorder %s52, %s53
    %p67 = scmp.eq.s32.totalorder %s19, 1
    %p68 = por %p66, %p67
    %p70 = scmp.ne.s32.totalorder %s53, %s69
    %p71 = scmp.eq.s32.totalorder %s19, 0
    %p72 = por %p70, %p71
    %s73 = ssub.s32 %s13, %s20
    %p74 = scmp.eq.s32.totalorder %s73, 0
    %s76 = sadd.s32 %s75, 1
    %s77 = scalar_select %p74, %s75, %s76
    %p80 = pneg %p74
    %p81 = scmp.eq.s32.totalorder %s13, 1
    %p82 = por %p80, %p81
    %p83 = scmp.ne.s32.totalorder %s75, %s78
    %p84 = scmp.eq.s32.totalorder %s13, 0
    %p85 = por %p83, %p84
    %p86 = scmp.ne.s32.totalorder %s75, %s78
    %p87 = scmp.eq.s32.totalorder %s18, 1
    %p88 = por %p86, %p87
    %p89 = scmp.ne.s32.totalorder %s78, %s79
    %p90 = scmp.eq.s32.totalorder %s18, 0
    %p91 = por %p89, %p90
    %p92 = scmp.ne.s32.totalorder %s78, %s79
    %p93 = scmp.eq.s32.totalorder %s19, 1
    %p94 = por %p92, %p93
    %p96 = scmp.ne.s32.totalorder %s79, %s95
    %p97 = scmp.eq.s32.totalorder %s19, 0
    %p98 = por %p96, %p97
    %s100 = sadd.s32 %s99, 1
    %p103 = scmp.eq.s32.totalorder %s13, 1
    %p104 = scmp.ne.s32.totalorder %s99, %s101
    %p105 = scmp.eq.s32.totalorder %s13, 0
    %p106 = por %p104, %p105
    %p107 = scmp.ne.s32.totalorder %s99, %s101
    %p108 = scmp.eq.s32.totalorder %s18, 1
    %p109 = por %p107, %p108
    %p110 = scmp.ne.s32.totalorder %s101, %s102
    %p111 = scmp.eq.s32.totalorder %s18, 0
    %p112 = por %p110, %p111
    %p113 = scmp.ne.s32.totalorder %s101, %s102
    %p114 = scmp.eq.s32.totalorder %s19, 1
    %p115 = por %p113, %p114
    %p117 = scmp.ne.s32.totalorder %s102, %s116
    %p118 = scmp.eq.s32.totalorder %s19, 0
    %p119 = por %p117, %p118
    %s121 = sadd.s32 %s120, 1
    %p124 = scmp.eq.s32.totalorder %s13, 1
    %p125 = scmp.ne.s32.totalorder %s120, %s122
    %p126 = scmp.eq.s32.totalorder %s13, 0
    %p127 = por %p125, %p126
    %p128 = scmp.ne.s32.totalorder %s120, %s122
    %p129 = scmp.eq.s32.totalorder %s18, 1
    %p130 = por %p128, %p129
    %p131 = scmp.ne.s32.totalorder %s122, %s123
    %p132 = scmp.eq.s32.totalorder %s18, 0
    %p133 = por %p131, %p132
    %p134 = scmp.ne.s32.totalorder %s122, %s123
    %p135 = scmp.eq.s32.totalorder %s19, 1
    %p136 = por %p134, %p135
    %p138 = scmp.ne.s32.totalorder %s123, %s137
    %p139 = scmp.eq.s32.totalorder %s19, 0
    %p140 = por %p138, %p139
    %s142 = sadd.s32 %s141, 1
    %p145 = scmp.eq.s32.totalorder %s13, 1
    %p146 = scmp.ne.s32.totalorder %s141, %s143
    %p147 = scmp.eq.s32.totalorder %s13, 0
    %p148 = por %p146, %p147
    %p149 = scmp.ne.s32.totalorder %s141, %s143
    %p150 = scmp.eq.s32.totalorder %s18, 1
    %p151 = por %p149, %p150
    %p152 = scmp.ne.s32.totalorder %s143, %s144
    %p153 = scmp.eq.s32.totalorder %s18, 0
    %p154 = por %p152, %p153
    %p155 = scmp.ne.s32.totalorder %s143, %s144
    %p156 = scmp.eq.s32.totalorder %s19, 1
    %p157 = por %p155, %p156
    %p159 = scmp.ne.s32.totalorder %s144, %s158
    %p160 = scmp.eq.s32.totalorder %s19, 0
    %p161 = por %p159, %p160
    %s163 = sadd.s32 %s162, 1
    %p166 = scmp.eq.s32.totalorder %s13, 1
    %p167 = scmp.ne.s32.totalorder %s162, %s164
    %p168 = scmp.eq.s32.totalorder %s13, 0
    %p169 = por %p167, %p168
    %p170 = scmp.ne.s32.totalorder %s162, %s164
    %p171 = scmp.eq.s32.totalorder %s18, 1
    %p172 = por %p170, %p171
    %p173 = scmp.ne.s32.totalorder %s164, %s165
    %p174 = scmp.eq.s32.totalorder %s18, 0
    %p175 = por %p173, %p174
    %p176 = scmp.ne.s32.totalorder %s164, %s165
    %p177 = scmp.eq.s32.totalorder %s19, 1
    %p178 = por %p176, %p177
    %p180 = scmp.ne.s32.totalorder %s165, %s179
    %p181 = scmp.eq.s32.totalorder %s19, 0
    %p182 = por %p180, %p181
    %s183 = ssub.s32 %s13, %s20
    %p184 = scmp.eq.s32.totalorder %s183, 0
    %s186 = sadd.s32 %s185, 1
    %s187 = scalar_select %p184, %s185, %s186
    %p190 = pneg %p184
    %p191 = scmp.eq.s32.totalorder %s13, 1
    %p192 = por %p190, %p191
    %p193 = scmp.ne.s32.totalorder %s185, %s188
    %p194 = scmp.eq.s32.totalorder %s13, 0
    %p195 = por %p193, %p194
    %p196 = scmp.ne.s32.totalorder %s185, %s188
    %p197 = scmp.eq.s32.totalorder %s18, 1
    %p198 = por %p196, %p197
    %p199 = scmp.ne.s32.totalorder %s188, %s189
    %p200 = scmp.eq.s32.totalorder %s18, 0
    %p201 = por %p199, %p200
    %p202 = scmp.ne.s32.totalorder %s188, %s189
    %p203 = scmp.eq.s32.totalorder %s19, 1
    %p204 = por %p202, %p203
    %p206 = scmp.ne.s32.totalorder %s189, %s205
    %p207 = scmp.eq.s32.totalorder %s19, 0
    %p208 = por %p206, %p207
    %p209 = scmp.le.s32.totalorder 1, %s13
    %p210 = scmp.lt.s32.totalorder %s13, 3
    %p211 = pnand %p209, %p210
    %p212 = pneg %p211
    // Predicated region
    $region9: #{tpu_custom_call.1} parent=5 // pred_check
      _
    $region10: #{tpu_custom_call.1} parent=5 // pred_check_branch
      %214 = sbr.rel (%p211) target = $region12
    $region11: #{tpu_custom_call.1} parent=5 // pred_region
      %s215 = ssub.s32 %s13, 1
      // Predicated region
      $region13: #{tpu_custom_call.1} parent=11 // pred_check
        %p216 = pneg %p112
      $region14: #{tpu_custom_call.1} parent=11 // pred_check_branch
        %218 = sbr.rel (%p216) target = $region16
      $region15: #{tpu_custom_call.1} parent=11 // pred_region
        _
      $region16: #{tpu_custom_call.1} parent=11 // pred_fallthru
        _
      // Predicated region
      $region17: #{tpu_custom_call.1} parent=11 // pred_check
        %p219 = pneg %p133
      $region18: #{tpu_custom_call.1} parent=11 // pred_check_branch
        %221 = sbr.rel (%p219) target = $region20
      $region19: #{tpu_custom_call.1} parent=11 // pred_region
        _
      $region20: #{tpu_custom_call.1} parent=11 // pred_fallthru
        _
      // Predicated region
      $region21: #{tpu_custom_call.1} parent=11 // pred_check
        %p222 = pneg %p154
      $region22: #{tpu_custom_call.1} parent=11 // pred_check_branch
        %224 = sbr.rel (%p222) target = $region24
      $region23: #{tpu_custom_call.1} parent=11 // pred_region
        _
      $region24: #{tpu_custom_call.1} parent=11 // pred_fallthru
        _
      // Predicated region
      $region25: #{tpu_custom_call.1} parent=11 // pred_check
        %p225 = pneg %p175
      $region26: #{tpu_custom_call.1} parent=11 // pred_check_branch
        %227 = sbr.rel (%p225) target = $region28
      $region27: #{tpu_custom_call.1} parent=11 // pred_region
        _
      $region28: #{tpu_custom_call.1} parent=11 // pred_fallthru
        _
    $region12: #{tpu_custom_call.1} parent=5 // pred_fallthru
      _
    %p228 = scmp.lt.s32.totalorder %s13, 2
    // Predicated region
    $region29: #{tpu_custom_call.1} parent=5 // pred_check
      %p229 = pneg %p228
    $region30: #{tpu_custom_call.1} parent=5 // pred_check_branch
      %231 = sbr.rel (%p229) target = $region32
    $region31: #{tpu_custom_call.1} parent=5 // pred_region
      // Predicated region
      $region33: #{tpu_custom_call.1} parent=31 // pred_check
        %p232 = pneg %p33
      $region34: #{tpu_custom_call.1} parent=31 // pred_check_branch
        %234 = sbr.rel (%p232) target = $region36
      $region35: #{tpu_custom_call.1} parent=31 // pred_region
        %s235 = smul.u32 16, %s13
        %p236 = scmp.lt.s32.totalorder %s235, 31
        %s237 = scalar_select %p236, %s235, 31
        %s238 = smul.addr %s237, 8
        %s239 = scalar_lea.vmem %s0, %s238
        %s240 = smul.u32 16, %s13
      $region36: #{tpu_custom_call.1} parent=31 // pred_fallthru
        _
      // Predicated region
      $region37: #{tpu_custom_call.1} parent=31 // pred_check
        %p241 = pneg %p59
      $region38: #{tpu_custom_call.1} parent=31 // pred_check_branch
        %243 = sbr.rel (%p241) target = $region40
      $region39: #{tpu_custom_call.1} parent=31 // pred_region
        %s244 = smul.u32 16, %s13
        %p245 = scmp.lt.s32.totalorder %s244, 31
        %s246 = scalar_select %p245, %s244, 31
        %s247 = smul.addr %s246, 8
        %s248 = scalar_lea.vmem %s1, %s247
        %s249 = smul.u32 16, %s13
      $region40: #{tpu_custom_call.1} parent=31 // pred_fallthru
        _
      // Predicated region
      $region41: #{tpu_custom_call.1} parent=31 // pred_check
        %p250 = pneg %p85
      $region42: #{tpu_custom_call.1} parent=31 // pred_check_branch
        %252 = sbr.rel (%p250) target = $region44
      $region43: #{tpu_custom_call.1} parent=31 // pred_region
        %s253 = smul.u32 16, %s13
        %p254 = scmp.lt.s32.totalorder %s253, 31
        %s255 = scalar_select %p254, %s253, 31
        %s256 = smul.addr %s255, 8
        %s257 = scalar_lea.vmem %s2, %s256
        %s258 = smul.u32 16, %s13
      $region44: #{tpu_custom_call.1} parent=31 // pred_fallthru
        _
    $region32: #{tpu_custom_call.1} parent=5 // pred_fallthru
      _
    %p259 = scmp.le.s32.totalorder 1, %s13
    %p260 = scmp.lt.s32.totalorder %s13, 3
    %p261 = pnand %p259, %p260
    %p262 = pneg %p261
    // Predicated region
    $region45: #{tpu_custom_call.1} parent=5 // pred_check
      _
    $region46: #{tpu_custom_call.1} parent=5 // pred_check_branch
      %264 = sbr.rel (%p261) target = $region48
    $region47: #{tpu_custom_call.1} parent=5 // pred_region
      %s265 = ssub.s32 %s13, 1
      %s266 = smul.u32 16, %s18
      %p267 = scmp.lt.s32.totalorder %s266, 31
      %s268 = scalar_select %p267, %s266, 31
      %s269 = smul.addr %s268, 8
      %s270 = scalar_lea.vmem %s0, %s269
      %p271 = pneg %p39
      %p272 = pneg %p36
      %s273 = smul.u32 16, %s18
      %p274 = scmp.lt.s32.totalorder %s273, 31
      %s275 = scalar_select %p274, %s273, 31
      %s276 = smul.addr %s275, 8
      %s277 = scalar_lea.vmem %s1, %s276
      %p278 = pneg %p65
      %p279 = pneg %p62
      %s280 = smul.u32 16, %s18
      %p281 = scmp.lt.s32.totalorder %s280, 31
      %s282 = scalar_select %p281, %s280, 31
      %s283 = smul.addr %s282, 8
      %s284 = scalar_lea.vmem %s2, %s283
      %p285 = pneg %p91
      %p286 = pneg %p88
      %p287 = pneg %p112
      %p288 = pneg %p109
      %p289 = pneg %p133
      %p290 = pneg %p130
      %p291 = pneg %p154
      %p292 = pneg %p151
      %p293 = pneg %p175
      %p294 = pneg %p172
      %p295 = pneg %p201
      %p296 = pneg %p198
      %s297 = smul.u32 16, %s18
      %p298 = scmp.lt.s32.totalorder %s297, 31
      %s299 = scalar_select %p298, %s297, 31
      %s300 = smul.addr %s299, 8
      %s301 = scalar_lea.vmem %s7, %s300
      %s302 = smul.u32 16, %s18
      %p303 = scmp.lt.s32.totalorder %s302, 31
      %s304 = scalar_select %p303, %s302, 31
      %s305 = smul.addr %s304, 8
      %s306 = scalar_lea.vmem %s0, %s305
      %s307 = smul.u32 16, %s18
      %s308 = smul.u32 16, %s18
      %p309 = scmp.lt.s32.totalorder %s308, 31
      %s310 = scalar_select %p309, %s308, 31
      %s311 = smul.addr %s310, 8
      %s312 = scalar_lea.vmem %s1, %s311
      %s313 = smul.u32 16, %s18
      %s314 = smul.u32 16, %s18
      %p315 = scmp.lt.s32.totalorder %s314, 31
      %s316 = scalar_select %p315, %s314, 31
      %s317 = smul.addr %s316, 8
      %s318 = scalar_lea.vmem %s2, %s317
      %s319 = smul.u32 16, %s18
      %s320 = smul.u32 16, %s18
      %p321 = scmp.lt.s32.totalorder %s320, 31
      %s322 = scalar_select %p321, %s320, 31
      %s323 = smul.addr %s322, 8
      %s324 = scalar_lea.vmem %s7, %s323
      %s325 = smul.u32 16, %s18
      %v326 = vld [vmem:[%s306] sm:$0xff]
      %v327 = vld [vmem:[%s306 + $0x8] sm:$0xff]
      %v328 = vld [vmem:[%s306 + $0x10] sm:$0xff]
      %v329 = vld [vmem:[%s306 + $0x18] sm:$0xff]
      %v330 = vld [vmem:[%s306 + $0x20] sm:$0xff]
      %v331 = vld [vmem:[%s306 + $0x28] sm:$0xff]
      %v332 = vld [vmem:[%s306 + $0x30] sm:$0xff]
      %v333 = vld [vmem:[%s306 + $0x38] sm:$0xff]
      %v334 = vld [vmem:[%s306 + $0x40] sm:$0xff]
      %v335 = vld [vmem:[%s306 + $0x48] sm:$0xff]
      %v336 = vld [vmem:[%s306 + $0x50] sm:$0xff]
      %v337 = vld [vmem:[%s306 + $0x58] sm:$0xff]
      %v338 = vld [vmem:[%s306 + $0x60] sm:$0xff]
      %v339 = vld [vmem:[%s306 + $0x68] sm:$0xff]
      %v340 = vld [vmem:[%s306 + $0x70] sm:$0xff]
      %v341 = vld [vmem:[%s306 + $0x78] sm:$0xff]
      %v342 = vld [vmem:[%s3] sm:$0xff]
      %v343 = vld [vmem:[%s3 + $0x8] sm:$0xff]
      %v344 = vld [vmem:[%s3 + $0x10] sm:$0xff]
      %v345 = vld [vmem:[%s3 + $0x18] sm:$0xff]
      %v346 = vld [vmem:[%s312] sm:$0xff]
      %v347 = vld [vmem:[%s312 + $0x8] sm:$0xff]
      %v348 = vld [vmem:[%s312 + $0x10] sm:$0xff]
      %v349 = vld [vmem:[%s312 + $0x18] sm:$0xff]
      %v350 = vld [vmem:[%s312 + $0x20] sm:$0xff]
      %v351 = vld [vmem:[%s312 + $0x28] sm:$0xff]
      %v352 = vld [vmem:[%s312 + $0x30] sm:$0xff]
      %v353 = vld [vmem:[%s312 + $0x38] sm:$0xff]
      %v354 = vld [vmem:[%s312 + $0x40] sm:$0xff]
      %v355 = vld [vmem:[%s312 + $0x48] sm:$0xff]
      %v356 = vld [vmem:[%s312 + $0x50] sm:$0xff]
      %v357 = vld [vmem:[%s312 + $0x58] sm:$0xff]
      %v358 = vld [vmem:[%s312 + $0x60] sm:$0xff]
      %v359 = vld [vmem:[%s312 + $0x68] sm:$0xff]
      %v360 = vld [vmem:[%s312 + $0x70] sm:$0xff]
      %v361 = vld [vmem:[%s312 + $0x78] sm:$0xff]
      %v362 = vld [vmem:[%s4] sm:$0xff]
      %v363 = vld [vmem:[%s4 + $0x8] sm:$0xff]
      %v364 = vld [vmem:[%s4 + $0x10] sm:$0xff]
      %v365 = vld [vmem:[%s4 + $0x18] sm:$0xff]
      %vm366 = vcmask 261120
      %v368 = vsel %vm366, %v346, 0
      %v371 = vsel %vm366, %v347, 0
      %v374 = vsel %vm366, %v348, 0
      %v377 = vsel %vm366, %v349, 0
      %v380 = vsel %vm366, %v350, 0
      %v383 = vsel %vm366, %v351, 0
      %v386 = vsel %vm366, %v352, 0
      %v389 = vsel %vm366, %v353, 0
      %v392 = vsel %vm366, %v354, 0
      %v395 = vsel %vm366, %v355, 0
      %v398 = vsel %vm366, %v356, 0
      %v401 = vsel %vm366, %v357, 0
      %v404 = vsel %vm366, %v358, 0
      %v407 = vsel %vm366, %v359, 0
      %v410 = vsel %vm366, %v360, 0
      %v413 = vsel %vm366, %v361, 0
      %415 = vmatpush.msra.mxu0 0.0
      %416 = vmatpush.msra.mxu0 0.0
      %417 = vmatpush.msra.mxu0 0.0
      %418 = vmatpush.msra.mxu0 0.0
      %419 = vmatpush.msra.mxu0 0.0
      %420 = vmatpush.msra.mxu0 0.0
      %421 = vmatpush.msra.mxu0 0.0
      %422 = vmatpush.msra.mxu0 0.0
      %423 = vmatpush.msra.mxu0 0.0
      %424 = vmatpush.msra.mxu0 0.0
      %425 = vmatpush.msra.mxu0 0.0
      %426 = vmatpush.msra.mxu0 0.0
      %427 = vmatpush.msra.mxu0 %v365
      %428 = vmatpush.msra.mxu0 %v364
      %429 = vmatpush.msra.mxu0 %v363
      %430 = vmatpush.msra.mxu0 %v362
      %431 = vmatmul.f32.gmra.mxu0 %v368
      %v432 = vpop.f32.mrf.mxu0
      %v433 = vadd.f32 0.0, %v432
      %434 = vmatmul.f32.gmra.mxu0 %v371
      %v435 = vpop.f32.mrf.mxu0
      %v436 = vadd.f32 0.0, %v435
      %437 = vmatmul.f32.gmra.mxu0 %v374
      %v438 = vpop.f32.mrf.mxu0
      %v439 = vadd.f32 0.0, %v438
      %440 = vmatmul.f32.gmra.mxu0 %v377
      %v441 = vpop.f32.mrf.mxu0
      %v442 = vadd.f32 0.0, %v441
      %443 = vmatmul.f32.gmra.mxu0 %v380
      %v444 = vpop.f32.mrf.mxu0
      %v445 = vadd.f32 0.0, %v444
      %446 = vmatmul.f32.gmra.mxu0 %v383
      %v447 = vpop.f32.mrf.mxu0
      %v448 = vadd.f32 0.0, %v447
      %449 = vmatmul.f32.gmra.mxu0 %v386
      %v450 = vpop.f32.mrf.mxu0
      %v451 = vadd.f32 0.0, %v450
      %452 = vmatmul.f32.gmra.mxu0 %v389
      %v453 = vpop.f32.mrf.mxu0
      %v454 = vadd.f32 0.0, %v453
      %455 = vmatmul.f32.gmra.mxu0 %v392
      %v456 = vpop.f32.mrf.mxu0
      %v457 = vadd.f32 0.0, %v456
      %458 = vmatmul.f32.gmra.mxu0 %v395
      %v459 = vpop.f32.mrf.mxu0
      %v460 = vadd.f32 0.0, %v459
      %461 = vmatmul.f32.gmra.mxu0 %v398
      %v462 = vpop.f32.mrf.mxu0
      %v463 = vadd.f32 0.0, %v462
      %464 = vmatmul.f32.gmra.mxu0 %v401
      %v465 = vpop.f32.mrf.mxu0
      %v466 = vadd.f32 0.0, %v465
      %467 = vmatmul.f32.gmra.mxu0 %v404
      %v468 = vpop.f32.mrf.mxu0
      %v469 = vadd.f32 0.0, %v468
      %470 = vmatmul.f32.gmra.mxu0 %v407
      %v471 = vpop.f32.mrf.mxu0
      %v472 = vadd.f32 0.0, %v471
      %473 = vmatmul.f32.gmra.mxu0 %v410
      %v474 = vpop.f32.mrf.mxu0
      %v475 = vadd.f32 0.0, %v474
      %476 = vmatmul.f32.gmra.mxu0 %v413
      %v477 = vpop.f32.mrf.mxu0
      %v478 = vadd.f32 0.0, %v477
      %479 = vdwg.mxu0
      %v481 = vsel %vm366, %v326, 0
      %v484 = vsel %vm366, %v327, 0
      %v487 = vsel %vm366, %v328, 0
      %v490 = vsel %vm366, %v329, 0
      %v493 = vsel %vm366, %v330, 0
      %v496 = vsel %vm366, %v331, 0
      %v499 = vsel %vm366, %v332, 0
      %v502 = vsel %vm366, %v333, 0
      %v505 = vsel %vm366, %v334, 0
      %v508 = vsel %vm366, %v335, 0
      %v511 = vsel %vm366, %v336, 0
      %v514 = vsel %vm366, %v337, 0
      %v517 = vsel %vm366, %v338, 0
      %v520 = vsel %vm366, %v339, 0
      %v523 = vsel %vm366, %v340, 0
      %v526 = vsel %vm366, %v341, 0
      %528 = vmatpush.msra.mxu0 0.0
      %529 = vmatpush.msra.mxu0 0.0
      %530 = vmatpush.msra.mxu0 0.0
      %531 = vmatpush.msra.mxu0 0.0
      %532 = vmatpush.msra.mxu0 0.0
      %533 = vmatpush.msra.mxu0 0.0
      %534 = vmatpush.msra.mxu0 0.0
      %535 = vmatpush.msra.mxu0 0.0
      %536 = vmatpush.msra.mxu0 0.0
      %537 = vmatpush.msra.mxu0 0.0
      %538 = vmatpush.msra.mxu0 0.0
      %539 = vmatpush.msra.mxu0 0.0
      %540 = vmatpush.msra.mxu0 %v345
      %541 = vmatpush.msra.mxu0 %v344
      %542 = vmatpush.msra.mxu0 %v343
      %543 = vmatpush.msra.mxu0 %v342
      %544 = vmatmul.f32.gmra.mxu0 %v481
      %v545 = vpop.f32.mrf.mxu0
      %v546 = vadd.f32 %v433, %v545
      %547 = vmatmul.f32.gmra.mxu0 %v484
      %v548 = vpop.f32.mrf.mxu0
      %v549 = vadd.f32 %v436, %v548
      %550 = vmatmul.f32.gmra.mxu0 %v487
      %v551 = vpop.f32.mrf.mxu0
      %v552 = vadd.f32 %v439, %v551
      %553 = vmatmul.f32.gmra.mxu0 %v490
      %v554 = vpop.f32.mrf.mxu0
      %v555 = vadd.f32 %v442, %v554
      %556 = vmatmul.f32.gmra.mxu0 %v493
      %v557 = vpop.f32.mrf.mxu0
      %v558 = vadd.f32 %v445, %v557
      %559 = vmatmul.f32.gmra.mxu0 %v496
      %v560 = vpop.f32.mrf.mxu0
      %v561 = vadd.f32 %v448, %v560
      %562 = vmatmul.f32.gmra.mxu0 %v499
      %v563 = vpop.f32.mrf.mxu0
      %v564 = vadd.f32 %v451, %v563
      %565 = vmatmul.f32.gmra.mxu0 %v502
      %v566 = vpop.f32.mrf.mxu0
      %v567 = vadd.f32 %v454, %v566
      %568 = vmatmul.f32.gmra.mxu0 %v505
      %v569 = vpop.f32.mrf.mxu0
      %v570 = vadd.f32 %v457, %v569
      %571 = vmatmul.f32.gmra.mxu0 %v508
      %v572 = vpop.f32.mrf.mxu0
      %v573 = vadd.f32 %v460, %v572
      %574 = vmatmul.f32.gmra.mxu0 %v511
      %v575 = vpop.f32.mrf.mxu0
      %v576 = vadd.f32 %v463, %v575
      %577 = vmatmul.f32.gmra.mxu0 %v514
      %v578 = vpop.f32.mrf.mxu0
      %v579 = vadd.f32 %v466, %v578
      %580 = vmatmul.f32.gmra.mxu0 %v517
      %v581 = vpop.f32.mrf.mxu0
      %v582 = vadd.f32 %v469, %v581
      %583 = vmatmul.f32.gmra.mxu0 %v520
      %v584 = vpop.f32.mrf.mxu0
      %v585 = vadd.f32 %v472, %v584
      %586 = vmatmul.f32.gmra.mxu0 %v523
      %v587 = vpop.f32.mrf.mxu0
      %v588 = vadd.f32 %v475, %v587
      %589 = vmatmul.f32.gmra.mxu0 %v526
      %v590 = vpop.f32.mrf.mxu0
      %v591 = vadd.f32 %v478, %v590
      %592 = vdwg.mxu0
      %v593 = vld [vmem:[%s318] sm:$0xff]
      %v594 = vld [vmem:[%s318 + $0x8] sm:$0xff]
      %v595 = vld [vmem:[%s318 + $0x10] sm:$0xff]
      %v596 = vld [vmem:[%s318 + $0x18] sm:$0xff]
      %v597 = vld [vmem:[%s318 + $0x20] sm:$0xff]
      %v598 = vld [vmem:[%s318 + $0x28] sm:$0xff]
      %v599 = vld [vmem:[%s318 + $0x30] sm:$0xff]
      %v600 = vld [vmem:[%s318 + $0x38] sm:$0xff]
      %v601 = vld [vmem:[%s318 + $0x40] sm:$0xff]
      %v602 = vld [vmem:[%s318 + $0x48] sm:$0xff]
      %v603 = vld [vmem:[%s318 + $0x50] sm:$0xff]
      %v604 = vld [vmem:[%s318 + $0x58] sm:$0xff]
      %v605 = vld [vmem:[%s318 + $0x60] sm:$0xff]
      %v606 = vld [vmem:[%s318 + $0x68] sm:$0xff]
      %v607 = vld [vmem:[%s318 + $0x70] sm:$0xff]
      %v608 = vld [vmem:[%s318 + $0x78] sm:$0xff]
      %v609 = vld [vmem:[%s5] sm:$0xff]
      %v610 = vld [vmem:[%s5 + $0x8] sm:$0xff]
      %v611 = vld [vmem:[%s5 + $0x10] sm:$0xff]
      %v612 = vld [vmem:[%s5 + $0x18] sm:$0xff]
      %v614 = vsel %vm366, %v593, 0
      %v617 = vsel %vm366, %v594, 0
      %v620 = vsel %vm366, %v595, 0
      %v623 = vsel %vm366, %v596, 0
      %v626 = vsel %vm366, %v597, 0
      %v629 = vsel %vm366, %v598, 0
      %v632 = vsel %vm366, %v599, 0
      %v635 = vsel %vm366, %v600, 0
      %v638 = vsel %vm366, %v601, 0
      %v641 = vsel %vm366, %v602, 0
      %v644 = vsel %vm366, %v603, 0
      %v647 = vsel %vm366, %v604, 0
      %v650 = vsel %vm366, %v605, 0
      %v653 = vsel %vm366, %v606, 0
      %v656 = vsel %vm366, %v607, 0
      %v659 = vsel %vm366, %v608, 0
      %661 = vmatpush.msra.mxu0 0.0
      %662 = vmatpush.msra.mxu0 0.0
      %663 = vmatpush.msra.mxu0 0.0
      %664 = vmatpush.msra.mxu0 0.0
      %665 = vmatpush.msra.mxu0 0.0
      %666 = vmatpush.msra.mxu0 0.0
      %667 = vmatpush.msra.mxu0 0.0
      %668 = vmatpush.msra.mxu0 0.0
      %669 = vmatpush.msra.mxu0 0.0
      %670 = vmatpush.msra.mxu0 0.0
      %671 = vmatpush.msra.mxu0 0.0
      %672 = vmatpush.msra.mxu0 0.0
      %673 = vmatpush.msra.mxu0 %v612
      %674 = vmatpush.msra.mxu0 %v611
      %675 = vmatpush.msra.mxu0 %v610
      %676 = vmatpush.msra.mxu0 %v609
      %677 = vmatmul.f32.gmra.mxu0 %v614
      %v678 = vpop.f32.mrf.mxu0
      %v679 = vadd.f32 0.0, %v678
      %680 = vmatmul.f32.gmra.mxu0 %v617
      %v681 = vpop.f32.mrf.mxu0
      %v682 = vadd.f32 0.0, %v681
      %683 = vmatmul.f32.gmra.mxu0 %v620
      %v684 = vpop.f32.mrf.mxu0
      %v685 = vadd.f32 0.0, %v684
      %686 = vmatmul.f32.gmra.mxu0 %v623
      %v687 = vpop.f32.mrf.mxu0
      %v688 = vadd.f32 0.0, %v687
      %689 = vmatmul.f32.gmra.mxu0 %v626
      %v690 = vpop.f32.mrf.mxu0
      %v691 = vadd.f32 0.0, %v690
      %692 = vmatmul.f32.gmra.mxu0 %v629
      %v693 = vpop.f32.mrf.mxu0
      %v694 = vadd.f32 0.0, %v693
      %695 = vmatmul.f32.gmra.mxu0 %v632
      %v696 = vpop.f32.mrf.mxu0
      %v697 = vadd.f32 0.0, %v696
      %698 = vmatmul.f32.gmra.mxu0 %v635
      %v699 = vpop.f32.mrf.mxu0
      %v700 = vadd.f32 0.0, %v699
      %701 = vmatmul.f32.gmra.mxu0 %v638
      %v702 = vpop.f32.mrf.mxu0
      %v703 = vadd.f32 0.0, %v702
      %704 = vmatmul.f32.gmra.mxu0 %v641
      %v705 = vpop.f32.mrf.mxu0
      %v706 = vadd.f32 0.0, %v705
      %707 = vmatmul.f32.gmra.mxu0 %v644
      %v708 = vpop.f32.mrf.mxu0
      %v709 = vadd.f32 0.0, %v708
      %710 = vmatmul.f32.gmra.mxu0 %v647
      %v711 = vpop.f32.mrf.mxu0
      %v712 = vadd.f32 0.0, %v711
      %713 = vmatmul.f32.gmra.mxu0 %v650
      %v714 = vpop.f32.mrf.mxu0
      %v715 = vadd.f32 0.0, %v714
      %716 = vmatmul.f32.gmra.mxu0 %v653
      %v717 = vpop.f32.mrf.mxu0
      %v718 = vadd.f32 0.0, %v717
      %719 = vmatmul.f32.gmra.mxu0 %v656
      %v720 = vpop.f32.mrf.mxu0
      %v721 = vadd.f32 0.0, %v720
      %722 = vmatmul.f32.gmra.mxu0 %v659
      %v723 = vpop.f32.mrf.mxu0
      %v724 = vadd.f32 0.0, %v723
      %725 = vdwg.mxu0
      %v726 = vadd.f32 %v546, %v679
      %v727 = vadd.f32 %v549, %v682
      %v728 = vadd.f32 %v552, %v685
      %v729 = vadd.f32 %v555, %v688
      %v730 = vadd.f32 %v558, %v691
      %v731 = vadd.f32 %v561, %v694
      %v732 = vadd.f32 %v564, %v697
      %v733 = vadd.f32 %v567, %v700
      %v734 = vadd.f32 %v570, %v703
      %v735 = vadd.f32 %v573, %v706
      %v736 = vadd.f32 %v576, %v709
      %v737 = vadd.f32 %v579, %v712
      %v738 = vadd.f32 %v582, %v715
      %v739 = vadd.f32 %v585, %v718
      %v740 = vadd.f32 %v588, %v721
      %v741 = vadd.f32 %v591, %v724
      %v742 = vld [vmem:[%s6] sm:$0x1]
      %v744 = vperm.slane %v742, 0
      %v746 = vadd.f32 %v726, %v744
      %v747 = vadd.f32 %v727, %v744
      %v748 = vadd.f32 %v728, %v744
      %v749 = vadd.f32 %v729, %v744
      %v750 = vadd.f32 %v730, %v744
      %v751 = vadd.f32 %v731, %v744
      %v752 = vadd.f32 %v732, %v744
      %v753 = vadd.f32 %v733, %v744
      %v754 = vadd.f32 %v734, %v744
      %v755 = vadd.f32 %v735, %v744
      %v756 = vadd.f32 %v736, %v744
      %v757 = vadd.f32 %v737, %v744
      %v758 = vadd.f32 %v738, %v744
      %v759 = vadd.f32 %v739, %v744
      %v760 = vadd.f32 %v740, %v744
      %v761 = vadd.f32 %v741, %v744
      %762 = vst.msk [vmem:[%s324] sm:$0xff] %vm366, %v746
      %763 = vst.msk [vmem:[%s324 + $0x8] sm:$0xff] %vm366, %v747
      %764 = vst.msk [vmem:[%s324 + $0x10] sm:$0xff] %vm366, %v748
      %765 = vst.msk [vmem:[%s324 + $0x18] sm:$0xff] %vm366, %v749
      %766 = vst.msk [vmem:[%s324 + $0x20] sm:$0xff] %vm366, %v750
      %767 = vst.msk [vmem:[%s324 + $0x28] sm:$0xff] %vm366, %v751
      %768 = vst.msk [vmem:[%s324 + $0x30] sm:$0xff] %vm366, %v752
      %769 = vst.msk [vmem:[%s324 + $0x38] sm:$0xff] %vm366, %v753
      %770 = vst.msk [vmem:[%s324 + $0x40] sm:$0xff] %vm366, %v754
      %771 = vst.msk [vmem:[%s324 + $0x48] sm:$0xff] %vm366, %v755
      %772 = vst.msk [vmem:[%s324 + $0x50] sm:$0xff] %vm366, %v756
      %773 = vst.msk [vmem:[%s324 + $0x58] sm:$0xff] %vm366, %v757
      %774 = vst.msk [vmem:[%s324 + $0x60] sm:$0xff] %vm366, %v758
      %775 = vst.msk [vmem:[%s324 + $0x68] sm:$0xff] %vm366, %v759
      %776 = vst.msk [vmem:[%s324 + $0x70] sm:$0xff] %vm366, %v760
      %777 = vst.msk [vmem:[%s324 + $0x78] sm:$0xff] %vm366, %v761
      %s778 = smul.u32 16, %s18
      %p779 = scmp.lt.s32.totalorder %s778, 31
      %s780 = scalar_select %p779, %s778, 31
      %s781 = smul.addr %s780, 8
      %s782 = scalar_lea.vmem %s7, %s781
      // Predicated region
      $region49: #{tpu_custom_call.1} parent=47 // pred_check
        %p783 = pneg %p198
      $region50: #{tpu_custom_call.1} parent=47 // pred_check_branch
        %785 = sbr.rel (%p783) target = $region52
      $region51: #{tpu_custom_call.1} parent=47 // pred_region
        %s786 = smul.u32 16, %s18
      $region52: #{tpu_custom_call.1} parent=47 // pred_fallthru
        _
    $region48: #{tpu_custom_call.1} parent=5 // pred_fallthru
      _
    %p787 = scmp.le.s32.totalorder 2, %s13
    // Predicated region
    $region53: #{tpu_custom_call.1} parent=5 // pred_check
      %p788 = pneg %p787
    $region54: #{tpu_custom_call.1} parent=5 // pred_check_branch
      %790 = sbr.rel (%p788) target = $region56
    $region55: #{tpu_custom_call.1} parent=5 // pred_region
      %s791 = ssub.s32 %s13, 2
      // Predicated region
      $region57: #{tpu_custom_call.1} parent=55 // pred_check
        %p792 = pneg %p204
      $region58: #{tpu_custom_call.1} parent=55 // pred_check_branch
        %794 = sbr.rel (%p792) target = $region60
      $region59: #{tpu_custom_call.1} parent=55 // pred_region
        %s795 = smul.u32 16, %s19
        %p796 = scmp.lt.s32.totalorder %s795, 31
        %s797 = scalar_select %p796, %s795, 31
        %s798 = smul.addr %s797, 8
        %s799 = scalar_lea.vmem %s7, %s798
      $region60: #{tpu_custom_call.1} parent=55 // pred_fallthru
        _
    $region56: #{tpu_custom_call.1} parent=5 // pred_fallthru
      _
  $region6: #{tpu_custom_call.1} parent=0 // loop_footer
    %s17 = sadd.s32 1, %s13
  $region7: #{tpu_custom_call.1} parent=0 // loop_footer_branch
    %12 = sbr.rel target = $region3
  $region8: #{tpu_custom_call.1} parent=0 // loop_exit
    _

</llo_original>
